<compile_context>
chip_gen: v7x
topology: tpu7x:2x2x1
jax: 0.10.0
libtpu: 0.0.40
codegen_flags: <defaults>
</compile_context>

<pallas_src>
import math

import jax
import jax.numpy as jnp
from jax.experimental import pallas as pl
from jax.experimental.pallas import tpu as pltpu

_LANE = 128


def _transfuse_kernel(
    pro_ref, gen_ref, snp_ref,            # batch-tiled activations
    m_sg_ref, b_sg_ref,                   # LayerSnp2gen  (pre-masked, (in,out))
    m_gp_ref, b_gp_ref,                   # LayerGen2pro
    m_br_s_ref, m_br_g_ref, b_br_ref,     # LayerBridge   (split: snp rows / gene rows)
    m_pp_ref, b_pp_ref,                   # LayerPro2pro
    w_h1_br_ref, w_h1_pr_ref, b_h1_ref,   # hidden1       (split: bridge rows / protein rows)
    w_h2_ref, b_h2_ref,                   # hidden2
    w_out_ref, b_out_ref,                 # output        (padded to lane-dense width)
    o_ref,
):
    def mm(x, w_ref):
        w = w_ref[...]
        return jnp.dot(x.astype(w.dtype), w, preferred_element_type=jnp.float32)

    in_pro = pro_ref[...]
    in_gen = gen_ref[...]
    in_snp = snp_ref[...]

    out_snp = jnp.maximum(mm(in_snp, m_sg_ref) + b_sg_ref[...], 0.0)
    out_gene = jnp.maximum(mm(in_gen, m_gp_ref) + b_gp_ref[...], 0.0)
    # LayerBridge on cat(out_snp, out_gene): concat replaced by two MXU
    # accumulations over the row-split masked weight (same FLOPs, no copies).
    out_bridge = jnp.maximum(
        mm(out_snp, m_br_s_ref) + mm(out_gene, m_br_g_ref) + b_br_ref[...], 0.0)
    out_protein = jnp.maximum(mm(in_pro, m_pp_ref) + b_pp_ref[...], 0.0)

    # TODO(synk): dropout1/2/3 are identity here (inference/eval semantics).
    # hidden1 on cat(out_bridge, out_protein): concat eliminated the same way.
    h1 = jnp.maximum(
        mm(out_bridge, w_h1_br_ref) + mm(out_protein, w_h1_pr_ref) + b_h1_ref[...],
        0.0)
    h2 = jnp.maximum(mm(h1, w_h2_ref) + b_h2_ref[...], 0.0)
    logits = mm(h2, w_out_ref) + b_out_ref[...]
    o_ref[...] = jax.nn.sigmoid(logits)


def transfuse_forward(in_mat, params, *, n_pro, n_gen, n_snp, d_out,
                      compute_dtype=jnp.float32, block_b=128):
    """Run TransFuse forward. `params` follow the PyTorch layout:
    omics weights (out_dims, in_dims), adj (in_dims, out_dims), Linear weights
    (out_dims, in_dims), biases (out_dims,) or (1, out_dims)."""
    (w_sg, a_sg, b_sg, w_gp, a_gp, b_gp, w_br, a_br, b_br,
     w_pp, a_pp, b_pp, w_h1, b_h1, w_h2, b_h2, w_out, b_out) = params

    f32 = jnp.float32
    cdt = compute_dtype

    # ---- weight preprocessing (pure function of the parameters) ----
    m_sg = (w_sg.T * a_sg).astype(cdt)                  # (n_snp, n_gen)
    m_gp = (w_gp.T * a_gp).astype(cdt)                  # (n_gen, n_pro)
    m_br = w_br.T * a_br                                # (n_gen+n_pro, n_pro)
    m_br_s = m_br[:n_gen].astype(cdt)
    m_br_g = m_br[n_gen:].astype(cdt)
    m_pp = (w_pp.T * a_pp).astype(cdt)                  # (n_pro, n_pro)

    w_h1T = w_h1.T                                      # (2*n_pro, H1)
    w_h1_br = w_h1T[:n_pro].astype(cdt)
    w_h1_pr = w_h1T[n_pro:].astype(cdt)
    w_h2T = w_h2.T.astype(cdt)                          # (H1, H2)

    H2 = w_h2.shape[0]
    # Lane-dense output: pad D_out to a multiple of 128 so the final store is
    # an unmasked vst; slice back after the call.
    d_pad = max(_LANE, pl.cdiv(d_out, _LANE) * _LANE)
    w_outT = jnp.zeros((H2, d_pad), cdt).at[:, :d_out].set(w_out.T.astype(cdt))
    b_out_p = jnp.zeros((1, d_pad), f32).at[:, :d_out].set(
        jnp.asarray(b_out, f32).reshape(1, -1))

    def as_bias(b):
        return jnp.asarray(b, f32).reshape(1, -1)

    b_sg, b_gp, b_br, b_pp, b_h1, b_h2 = map(
        as_bias, (b_sg, b_gp, b_br, b_pp, b_h1, b_h2))

    # ---- activations: split the feature matrix outside the kernel ----
    in_pro = in_mat[:, 0:n_pro]
    in_gen = in_mat[:, n_pro:n_pro + n_gen]
    in_snp = in_mat[:, n_pro + n_gen:n_pro + n_gen + n_snp]

    B = in_mat.shape[0]
    tb = min(block_b, B)
    n_blk = pl.cdiv(B, tb)
    B_pad = n_blk * tb
    if B_pad != B:
        padb = lambda x: jnp.pad(x, ((0, B_pad - B), (0, 0)))
        in_pro, in_gen, in_snp = padb(in_pro), padb(in_gen), padb(in_snp)

    def batch_spec(d):
        return pl.BlockSpec((tb, d), lambda i: (i, 0))

    def resident_spec(arr):
        # Same block index every grid step -> weight stays VMEM-resident.
        return pl.BlockSpec(arr.shape, lambda i: (0, 0))

    weights = (m_sg, b_sg, m_gp, b_gp, m_br_s, m_br_g, b_br, m_pp, b_pp,
               w_h1_br, w_h1_pr, b_h1, w_h2T, b_h2, w_outT, b_out_p)

    # TODO(synk): at real TransFuse scale (thousands of SNPs/genes) the omics
    # weights will not fit resident in VMEM (esp. v7x 64 MiB): add a K-tiled
    # "arbitrary" grid axis with an f32 VMEM accumulator, and optionally a
    # block-sparse variant (PrefetchScalarGridSpec) to skip zero adj blocks.
    out = pl.pallas_call(
        _transfuse_kernel,
        out_shape=jax.ShapeDtypeStruct((B_pad, d_pad), f32),
        grid=(n_blk,),
        in_specs=[batch_spec(n_pro), batch_spec(n_gen), batch_spec(n_snp)]
                 + [resident_spec(w) for w in weights],
        out_specs=pl.BlockSpec((tb, d_pad), lambda i: (i, 0)),
        compiler_params=pltpu.CompilerParams(
            dimension_semantics=("parallel",)),
    )(in_pro, in_gen, in_snp, *weights)

    return out[:B, :d_out]


def _init_layer(key, out_dims, in_dims):
    """Mimic PyTorch kaiming_uniform_(a=sqrt(5)) + uniform bias init."""
    kw, kb = jax.random.split(key)
    bound = 1.0 / math.sqrt(in_dims)
    w = jax.random.uniform(kw, (out_dims, in_dims), jnp.float32, -bound, bound)
    b = jax.random.uniform(kb, (1, out_dims), jnp.float32, -bound, bound)
    return w, b


def _reference(in_mat, params, *, n_pro, n_gen, n_snp):
    (w_sg, a_sg, b_sg, w_gp, a_gp, b_gp, w_br, a_br, b_br,
     w_pp, a_pp, b_pp, w_h1, b_h1, w_h2, b_h2, w_out, b_out) = params

    def omics(inp, w, a, b):
        return jax.nn.relu(inp @ (w.T * a) + b)

    in_pro = in_mat[:, :n_pro]
    in_gen = in_mat[:, n_pro:n_pro + n_gen]
    in_snp = in_mat[:, n_pro + n_gen:]
    out_snp = omics(in_snp, w_sg, a_sg, b_sg)
    out_gene = omics(in_gen, w_gp, a_gp, b_gp)
    out_bridge = omics(jnp.concatenate([out_snp, out_gene], 1), w_br, a_br, b_br)
    out_protein = omics(in_pro, w_pp, a_pp, b_pp)
    out_fuse = jnp.concatenate([out_bridge, out_protein], 1)
    h1 = jax.nn.relu(out_fuse @ w_h1.T + b_h1)
    h2 = jax.nn.relu(h1 @ w_h2.T + b_h2)
    return jax.nn.sigmoid(h2 @ w_out.T + b_out)


if __name__ == "__main__":
    # Small, self-consistent sizes.
    B, n_snp, n_gen, n_pro = 8, 16, 16, 16
    H1, H2, D_out = 32, 16, 4

    key = jax.random.PRNGKey(0)
    keys = jax.random.split(key, 12)

    # MultiOmicsLayer params (PyTorch shape: (out_dims, in_dims))
    w_sg, b_sg = _init_layer(keys[0], n_gen, n_snp)
    w_gp, b_gp = _init_layer(keys[1], n_pro, n_gen)
    w_br, b_br = _init_layer(keys[2], n_pro, n_gen + n_pro)
    w_pp, b_pp = _init_layer(keys[3], n_pro, n_pro)
    # nn.Linear params
    w_h1, b_h1 = _init_layer(keys[4], H1, 2 * n_pro)
    w_h2, b_h2 = _init_layer(keys[5], H2, H1)
    w_out, b_out = _init_layer(keys[6], D_out, H2)

    # Adjacency masks, shape (in_dims, out_dims), binary float32.
    a_sg = jax.random.bernoulli(keys[7], 0.5, (n_snp, n_gen)).astype(jnp.float32)
    a_gp = jax.random.bernoulli(keys[8], 0.5, (n_gen, n_pro)).astype(jnp.float32)
    a_br = jax.random.bernoulli(keys[9], 0.5, (n_gen + n_pro, n_pro)).astype(jnp.float32)
    a_pp = jax.random.bernoulli(keys[10], 0.5, (n_pro, n_pro)).astype(jnp.float32)

    in_mat = jax.random.normal(keys[11], (B, n_pro + n_gen + n_snp), jnp.float32)

    params = (w_sg, a_sg, b_sg, w_gp, a_gp, b_gp, w_br, a_br, b_br,
              w_pp, a_pp, b_pp, w_h1, b_h1, w_h2, b_h2, w_out, b_out)

    y_ref = _reference(in_mat, params, n_pro=n_pro, n_gen=n_gen, n_snp=n_snp)

    # f32 path: exact match against the reference.
    y = transfuse_forward(in_mat, params, n_pro=n_pro, n_gen=n_gen,
                          n_snp=n_snp, d_out=D_out)
    y = jax.block_until_ready(y)
    assert y.shape == (B, D_out)
    assert jnp.allclose(y, y_ref, atol=1e-5, rtol=1e-5)

    # bf16 matmul-operand path (v6e/v7x perf variant), f32 MXU accumulation.
    y_bf16 = transfuse_forward(in_mat, params, n_pro=n_pro, n_gen=n_gen,
                               n_snp=n_snp, d_out=D_out,
                               compute_dtype=jnp.bfloat16)
    y_bf16 = jax.block_until_ready(y_bf16)
    assert y_bf16.shape == (B, D_out)
    assert jnp.allclose(y_bf16, y_ref, atol=5e-2, rtol=5e-2)

    print("KERNEL_OK")
</pallas_src>

<mosaic_0001>
module attributes {stable_mosaic.version = 11 : i64} {
  func.func @_transfuse_kernel(%arg0: i32, %arg1: memref<8x16xf32, #tpu.memory_space<vmem>>, %arg2: memref<8x16xf32, #tpu.memory_space<vmem>>, %arg3: memref<8x16xf32, #tpu.memory_space<vmem>>, %arg4: memref<16x16xf32, #tpu.memory_space<vmem>>, %arg5: memref<1x16xf32, #tpu.memory_space<vmem>>, %arg6: memref<16x16xf32, #tpu.memory_space<vmem>>, %arg7: memref<1x16xf32, #tpu.memory_space<vmem>>, %arg8: memref<16x16xf32, #tpu.memory_space<vmem>>, %arg9: memref<16x16xf32, #tpu.memory_space<vmem>>, %arg10: memref<1x16xf32, #tpu.memory_space<vmem>>, %arg11: memref<16x16xf32, #tpu.memory_space<vmem>>, %arg12: memref<1x16xf32, #tpu.memory_space<vmem>>, %arg13: memref<16x32xf32, #tpu.memory_space<vmem>>, %arg14: memref<16x32xf32, #tpu.memory_space<vmem>>, %arg15: memref<1x32xf32, #tpu.memory_space<vmem>>, %arg16: memref<32x16xf32, #tpu.memory_space<vmem>>, %arg17: memref<1x16xf32, #tpu.memory_space<vmem>>, %arg18: memref<16x128xf32, #tpu.memory_space<vmem>>, %arg19: memref<1x128xf32, #tpu.memory_space<vmem>>, %arg20: memref<8x128xf32, #tpu.memory_space<vmem>>) attributes {dimension_semantics = [#tpu.dimension_semantics<parallel>], iteration_bounds = array<i64: 1>, scalar_prefetch = 0 : i64, scratch_operands = 0 : i64, tpu.core_type = #tpu.core_type<tc>, window_params = [{transform_indices = @transform_0, window_bounds = array<i64: 8, 16>}, {transform_indices = @transform_1, window_bounds = array<i64: 8, 16>}, {transform_indices = @transform_2, window_bounds = array<i64: 8, 16>}, {pipeline_mode = #tpu.pipeline_mode<synchronous>, transform_indices = @transform_3, window_bounds = array<i64: 16, 16>}, {pipeline_mode = #tpu.pipeline_mode<synchronous>, transform_indices = @transform_4, window_bounds = array<i64: 1, 16>}, {pipeline_mode = #tpu.pipeline_mode<synchronous>, transform_indices = @transform_5, window_bounds = array<i64: 16, 16>}, {pipeline_mode = #tpu.pipeline_mode<synchronous>, transform_indices = @transform_6, window_bounds = array<i64: 1, 16>}, {pipeline_mode = #tpu.pipeline_mode<synchronous>, transform_indices = @transform_7, window_bounds = array<i64: 16, 16>}, {pipeline_mode = #tpu.pipeline_mode<synchronous>, transform_indices = @transform_8, window_bounds = array<i64: 16, 16>}, {pipeline_mode = #tpu.pipeline_mode<synchronous>, transform_indices = @transform_9, window_bounds = array<i64: 1, 16>}, {pipeline_mode = #tpu.pipeline_mode<synchronous>, transform_indices = @transform_10, window_bounds = array<i64: 16, 16>}, {pipeline_mode = #tpu.pipeline_mode<synchronous>, transform_indices = @transform_11, window_bounds = array<i64: 1, 16>}, {pipeline_mode = #tpu.pipeline_mode<synchronous>, transform_indices = @transform_12, window_bounds = array<i64: 16, 32>}, {pipeline_mode = #tpu.pipeline_mode<synchronous>, transform_indices = @transform_13, window_bounds = array<i64: 16, 32>}, {pipeline_mode = #tpu.pipeline_mode<synchronous>, transform_indices = @transform_14, window_bounds = array<i64: 1, 32>}, {pipeline_mode = #tpu.pipeline_mode<synchronous>, transform_indices = @transform_15, window_bounds = array<i64: 32, 16>}, {pipeline_mode = #tpu.pipeline_mode<synchronous>, transform_indices = @transform_16, window_bounds = array<i64: 1, 16>}, {pipeline_mode = #tpu.pipeline_mode<synchronous>, transform_indices = @transform_17, window_bounds = array<i64: 16, 128>}, {pipeline_mode = #tpu.pipeline_mode<synchronous>, transform_indices = @transform_18, window_bounds = array<i64: 1, 128>}, {transform_indices = @transform_19, window_bounds = array<i64: 8, 128>}]} {
    %c0 = arith.constant 0 : index
    %c0_0 = arith.constant 0 : index
    %0 = vector.load %arg1[%c0, %c0_0] : memref<8x16xf32, #tpu.memory_space<vmem>>, vector<8x16xf32>
    %c0_1 = arith.constant 0 : index
    %c0_2 = arith.constant 0 : index
    %1 = vector.load %arg2[%c0_1, %c0_2] : memref<8x16xf32, #tpu.memory_space<vmem>>, vector<8x16xf32>
    %c0_3 = arith.constant 0 : index
    %c0_4 = arith.constant 0 : index
    %2 = vector.load %arg3[%c0_3, %c0_4] : memref<8x16xf32, #tpu.memory_space<vmem>>, vector<8x16xf32>
    %c0_5 = arith.constant 0 : index
    %c0_6 = arith.constant 0 : index
    %3 = vector.load %arg4[%c0_5, %c0_6] : memref<16x16xf32, #tpu.memory_space<vmem>>, vector<16x16xf32>
    %cst = arith.constant dense<0.000000e+00> : vector<8x16xf32>
    %4 = tpu.matmul %2, %3, %cst {dimension_numbers = #tpu.dot_dimension_numbers<[1], [0], [0], [1], [0, 0, 1, 1], [], []>} : vector<8x16xf32>, vector<16x16xf32>, vector<8x16xf32> -> vector<8x16xf32>
    %c0_7 = arith.constant 0 : index
    %c0_8 = arith.constant 0 : index
    %5 = vector.load %arg5[%c0_7, %c0_8] : memref<1x16xf32, #tpu.memory_space<vmem>>, vector<1x16xf32>
    %6 = vector.broadcast %5 : vector<1x16xf32> to vector<8x16xf32>
    %7 = arith.addf %4, %6 : vector<8x16xf32>
    %cst_9 = arith.constant 0.000000e+00 : f32
    %8 = vector.broadcast %cst_9 : f32 to vector<8x16xf32>
    %9 = arith.maximumf %7, %8 : vector<8x16xf32>
    %c0_10 = arith.constant 0 : index
    %c0_11 = arith.constant 0 : index
    %10 = vector.load %arg6[%c0_10, %c0_11] : memref<16x16xf32, #tpu.memory_space<vmem>>, vector<16x16xf32>
    %cst_12 = arith.constant dense<0.000000e+00> : vector<8x16xf32>
    %11 = tpu.matmul %1, %10, %cst_12 {dimension_numbers = #tpu.dot_dimension_numbers<[1], [0], [0], [1], [0, 0, 1, 1], [], []>} : vector<8x16xf32>, vector<16x16xf32>, vector<8x16xf32> -> vector<8x16xf32>
    %c0_13 = arith.constant 0 : index
    %c0_14 = arith.constant 0 : index
    %12 = vector.load %arg7[%c0_13, %c0_14] : memref<1x16xf32, #tpu.memory_space<vmem>>, vector<1x16xf32>
    %13 = vector.broadcast %12 : vector<1x16xf32> to vector<8x16xf32>
    %14 = arith.addf %11, %13 : vector<8x16xf32>
    %cst_15 = arith.constant 0.000000e+00 : f32
    %15 = vector.broadcast %cst_15 : f32 to vector<8x16xf32>
    %16 = arith.maximumf %14, %15 : vector<8x16xf32>
    %c0_16 = arith.constant 0 : index
    %c0_17 = arith.constant 0 : index
    %17 = vector.load %arg8[%c0_16, %c0_17] : memref<16x16xf32, #tpu.memory_space<vmem>>, vector<16x16xf32>
    %cst_18 = arith.constant dense<0.000000e+00> : vector<8x16xf32>
    %18 = tpu.matmul %9, %17, %cst_18 {dimension_numbers = #tpu.dot_dimension_numbers<[1], [0], [0], [1], [0, 0, 1, 1], [], []>} : vector<8x16xf32>, vector<16x16xf32>, vector<8x16xf32> -> vector<8x16xf32>
    %c0_19 = arith.constant 0 : index
    %c0_20 = arith.constant 0 : index
    %19 = vector.load %arg9[%c0_19, %c0_20] : memref<16x16xf32, #tpu.memory_space<vmem>>, vector<16x16xf32>
    %cst_21 = arith.constant dense<0.000000e+00> : vector<8x16xf32>
    %20 = tpu.matmul %16, %19, %cst_21 {dimension_numbers = #tpu.dot_dimension_numbers<[1], [0], [0], [1], [0, 0, 1, 1], [], []>} : vector<8x16xf32>, vector<16x16xf32>, vector<8x16xf32> -> vector<8x16xf32>
    %21 = arith.addf %18, %20 : vector<8x16xf32>
    %c0_22 = arith.constant 0 : index
    %c0_23 = arith.constant 0 : index
    %22 = vector.load %arg10[%c0_22, %c0_23] : memref<1x16xf32, #tpu.memory_space<vmem>>, vector<1x16xf32>
    %23 = vector.broadcast %22 : vector<1x16xf32> to vector<8x16xf32>
    %24 = arith.addf %21, %23 : vector<8x16xf32>
    %cst_24 = arith.constant 0.000000e+00 : f32
    %25 = vector.broadcast %cst_24 : f32 to vector<8x16xf32>
    %26 = arith.maximumf %24, %25 : vector<8x16xf32>
    %c0_25 = arith.constant 0 : index
    %c0_26 = arith.constant 0 : index
    %27 = vector.load %arg11[%c0_25, %c0_26] : memref<16x16xf32, #tpu.memory_space<vmem>>, vector<16x16xf32>
    %cst_27 = arith.constant dense<0.000000e+00> : vector<8x16xf32>
    %28 = tpu.matmul %0, %27, %cst_27 {dimension_numbers = #tpu.dot_dimension_numbers<[1], [0], [0], [1], [0, 0, 1, 1], [], []>} : vector<8x16xf32>, vector<16x16xf32>, vector<8x16xf32> -> vector<8x16xf32>
    %c0_28 = arith.constant 0 : index
    %c0_29 = arith.constant 0 : index
    %29 = vector.load %arg12[%c0_28, %c0_29] : memref<1x16xf32, #tpu.memory_space<vmem>>, vector<1x16xf32>
    %30 = vector.broadcast %29 : vector<1x16xf32> to vector<8x16xf32>
    %31 = arith.addf %28, %30 : vector<8x16xf32>
    %cst_30 = arith.constant 0.000000e+00 : f32
    %32 = vector.broadcast %cst_30 : f32 to vector<8x16xf32>
    %33 = arith.maximumf %31, %32 : vector<8x16xf32>
    %c0_31 = arith.constant 0 : index
    %c0_32 = arith.constant 0 : index
    %34 = vector.load %arg13[%c0_31, %c0_32] : memref<16x32xf32, #tpu.memory_space<vmem>>, vector<16x32xf32>
    %cst_33 = arith.constant dense<0.000000e+00> : vector<8x32xf32>
    %35 = tpu.matmul %26, %34, %cst_33 {dimension_numbers = #tpu.dot_dimension_numbers<[1], [0], [0], [1], [0, 0, 1, 1], [], []>} : vector<8x16xf32>, vector<16x32xf32>, vector<8x32xf32> -> vector<8x32xf32>
    %c0_34 = arith.constant 0 : index
    %c0_35 = arith.constant 0 : index
    %36 = vector.load %arg14[%c0_34, %c0_35] : memref<16x32xf32, #tpu.memory_space<vmem>>, vector<16x32xf32>
    %cst_36 = arith.constant dense<0.000000e+00> : vector<8x32xf32>
    %37 = tpu.matmul %33, %36, %cst_36 {dimension_numbers = #tpu.dot_dimension_numbers<[1], [0], [0], [1], [0, 0, 1, 1], [], []>} : vector<8x16xf32>, vector<16x32xf32>, vector<8x32xf32> -> vector<8x32xf32>
    %38 = arith.addf %35, %37 : vector<8x32xf32>
    %c0_37 = arith.constant 0 : index
    %c0_38 = arith.constant 0 : index
    %39 = vector.load %arg15[%c0_37, %c0_38] : memref<1x32xf32, #tpu.memory_space<vmem>>, vector<1x32xf32>
    %40 = vector.broadcast %39 : vector<1x32xf32> to vector<8x32xf32>
    %41 = arith.addf %38, %40 : vector<8x32xf32>
    %cst_39 = arith.constant 0.000000e+00 : f32
    %42 = vector.broadcast %cst_39 : f32 to vector<8x32xf32>
    %43 = arith.maximumf %41, %42 : vector<8x32xf32>
    %c0_40 = arith.constant 0 : index
    %c0_41 = arith.constant 0 : index
    %44 = vector.load %arg16[%c0_40, %c0_41] : memref<32x16xf32, #tpu.memory_space<vmem>>, vector<32x16xf32>
    %cst_42 = arith.constant dense<0.000000e+00> : vector<8x16xf32>
    %45 = tpu.matmul %43, %44, %cst_42 {dimension_numbers = #tpu.dot_dimension_numbers<[1], [0], [0], [1], [0, 0, 1, 1], [], []>} : vector<8x32xf32>, vector<32x16xf32>, vector<8x16xf32> -> vector<8x16xf32>
    %c0_43 = arith.constant 0 : index
    %c0_44 = arith.constant 0 : index
    %46 = vector.load %arg17[%c0_43, %c0_44] : memref<1x16xf32, #tpu.memory_space<vmem>>, vector<1x16xf32>
    %47 = vector.broadcast %46 : vector<1x16xf32> to vector<8x16xf32>
    %48 = arith.addf %45, %47 : vector<8x16xf32>
    %cst_45 = arith.constant 0.000000e+00 : f32
    %49 = vector.broadcast %cst_45 : f32 to vector<8x16xf32>
    %50 = arith.maximumf %48, %49 : vector<8x16xf32>
    %c0_46 = arith.constant 0 : index
    %c0_47 = arith.constant 0 : index
    %51 = vector.load %arg18[%c0_46, %c0_47] : memref<16x128xf32, #tpu.memory_space<vmem>>, vector<16x128xf32>
    %cst_48 = arith.constant dense<0.000000e+00> : vector<8x128xf32>
    %52 = tpu.matmul %50, %51, %cst_48 {dimension_numbers = #tpu.dot_dimension_numbers<[1], [0], [0], [1], [0, 0, 1, 1], [], []>} : vector<8x16xf32>, vector<16x128xf32>, vector<8x128xf32> -> vector<8x128xf32>
    %c0_49 = arith.constant 0 : index
    %c0_50 = arith.constant 0 : index
    %53 = vector.load %arg19[%c0_49, %c0_50] : memref<1x128xf32, #tpu.memory_space<vmem>>, vector<1x128xf32>
    %54 = vector.broadcast %53 : vector<1x128xf32> to vector<8x128xf32>
    %55 = arith.addf %52, %54 : vector<8x128xf32>
    %56 = arith.negf %55 : vector<8x128xf32>
    %57 = math.exp %56 : vector<8x128xf32>
    %cst_51 = arith.constant 1.000000e+00 : f32
    %58 = vector.broadcast %cst_51 : f32 to vector<8x128xf32>
    %59 = arith.addf %58, %57 : vector<8x128xf32>
    %60 = arith.divf %58, %59 : vector<8x128xf32>
    %c0_52 = arith.constant 0 : index
    %c0_53 = arith.constant 0 : index
    %61 = vector.load %arg20[%c0_52, %c0_53] : memref<8x128xf32, #tpu.memory_space<vmem>>, vector<8x128xf32>
    tpu.vector_store %arg20[%c0_52, %c0_53], %60 {strides = array<i32>} : memref<8x128xf32, #tpu.memory_space<vmem>>, vector<8x128xf32>,
    return
  }
  func.func @transform_0(%arg0: i32) -> (i32, i32) {
    %c0_i32 = arith.constant 0 : i32
    %c0_i32_0 = arith.constant 0 : i32
    return %arg0, %c0_i32 : i32, i32
  }
  func.func @transform_1(%arg0: i32) -> (i32, i32) {
    %c0_i32 = arith.constant 0 : i32
    %c0_i32_0 = arith.constant 0 : i32
    return %arg0, %c0_i32 : i32, i32
  }
  func.func @transform_2(%arg0: i32) -> (i32, i32) {
    %c0_i32 = arith.constant 0 : i32
    %c0_i32_0 = arith.constant 0 : i32
    return %arg0, %c0_i32 : i32, i32
  }
  func.func @transform_3(%arg0: i32) -> (i32, i32) {
    %c0_i32 = arith.constant 0 : i32
    %c0_i32_0 = arith.constant 0 : i32
    %c0_i32_1 = arith.constant 0 : i32
    return %c0_i32, %c0_i32_0 : i32, i32
  }
  func.func @transform_4(%arg0: i32) -> (i32, i32) {
    %c0_i32 = arith.constant 0 : i32
    %c0_i32_0 = arith.constant 0 : i32
    %c0_i32_1 = arith.constant 0 : i32
    return %c0_i32, %c0_i32_0 : i32, i32
  }
  func.func @transform_5(%arg0: i32) -> (i32, i32) {
    %c0_i32 = arith.constant 0 : i32
    %c0_i32_0 = arith.constant 0 : i32
    %c0_i32_1 = arith.constant 0 : i32
    return %c0_i32, %c0_i32_0 : i32, i32
  }
  func.func @transform_6(%arg0: i32) -> (i32, i32) {
    %c0_i32 = arith.constant 0 : i32
    %c0_i32_0 = arith.constant 0 : i32
    %c0_i32_1 = arith.constant 0 : i32
    return %c0_i32, %c0_i32_0 : i32, i32
  }
  func.func @transform_7(%arg0: i32) -> (i32, i32) {
    %c0_i32 = arith.constant 0 : i32
    %c0_i32_0 = arith.constant 0 : i32
    %c0_i32_1 = arith.constant 0 : i32
    return %c0_i32, %c0_i32_0 : i32, i32
  }
  func.func @transform_8(%arg0: i32) -> (i32, i32) {
    %c0_i32 = arith.constant 0 : i32
    %c0_i32_0 = arith.constant 0 : i32
    %c0_i32_1 = arith.constant 0 : i32
    return %c0_i32, %c0_i32_0 : i32, i32
  }
  func.func @transform_9(%arg0: i32) -> (i32, i32) {
    %c0_i32 = arith.constant 0 : i32
    %c0_i32_0 = arith.constant 0 : i32
    %c0_i32_1 = arith.constant 0 : i32
    return %c0_i32, %c0_i32_0 : i32, i32
  }
  func.func @transform_10(%arg0: i32) -> (i32, i32) {
    %c0_i32 = arith.constant 0 : i32
    %c0_i32_0 = arith.constant 0 : i32
    %c0_i32_1 = arith.constant 0 : i32
    return %c0_i32, %c0_i32_0 : i32, i32
  }
  func.func @transform_11(%arg0: i32) -> (i32, i32) {
    %c0_i32 = arith.constant 0 : i32
    %c0_i32_0 = arith.constant 0 : i32
    %c0_i32_1 = arith.constant 0 : i32
    return %c0_i32, %c0_i32_0 : i32, i32
  }
  func.func @transform_12(%arg0: i32) -> (i32, i32) {
    %c0_i32 = arith.constant 0 : i32
    %c0_i32_0 = arith.constant 0 : i32
    %c0_i32_1 = arith.constant 0 : i32
    return %c0_i32, %c0_i32_0 : i32, i32
  }
  func.func @transform_13(%arg0: i32) -> (i32, i32) {
    %c0_i32 = arith.constant 0 : i32
    %c0_i32_0 = arith.constant 0 : i32
    %c0_i32_1 = arith.constant 0 : i32
    return %c0_i32, %c0_i32_0 : i32, i32
  }
  func.func @transform_14(%arg0: i32) -> (i32, i32) {
    %c0_i32 = arith.constant 0 : i32
    %c0_i32_0 = arith.constant 0 : i32
    %c0_i32_1 = arith.constant 0 : i32
    return %c0_i32, %c0_i32_0 : i32, i32
  }
  func.func @transform_15(%arg0: i32) -> (i32, i32) {
    %c0_i32 = arith.constant 0 : i32
    %c0_i32_0 = arith.constant 0 : i32
    %c0_i32_1 = arith.constant 0 : i32
    return %c0_i32, %c0_i32_0 : i32, i32
  }
  func.func @transform_16(%arg0: i32) -> (i32, i32) {
    %c0_i32 = arith.constant 0 : i32
    %c0_i32_0 = arith.constant 0 : i32
    %c0_i32_1 = arith.constant 0 : i32
    return %c0_i32, %c0_i32_0 : i32, i32
  }
  func.func @transform_17(%arg0: i32) -> (i32, i32) {
    %c0_i32 = arith.constant 0 : i32
    %c0_i32_0 = arith.constant 0 : i32
    %c0_i32_1 = arith.constant 0 : i32
    return %c0_i32, %c0_i32_0 : i32, i32
  }
  func.func @transform_18(%arg0: i32) -> (i32, i32) {
    %c0_i32 = arith.constant 0 : i32
    %c0_i32_0 = arith.constant 0 : i32
    %c0_i32_1 = arith.constant 0 : i32
    return %c0_i32, %c0_i32_0 : i32, i32
  }
  func.func @transform_19(%arg0: i32) -> (i32, i32) {
    %c0_i32 = arith.constant 0 : i32
    %c0_i32_0 = arith.constant 0 : i32
    return %arg0, %c0_i32 : i32, i32
  }
}

</mosaic_0001>

<llo_original>
// kernel: tpu_custom_call.1
$region0: #{tpu_custom_call.1}
  #allocation0 [shape = 'u32[]', space=smem, size = 0x4, offset = 0x4, fixed_abs, tag = 'smem constant byte address 0x4 - core index']
  #allocation1 [shape = 'u32[144,128]{1,0:T(1,128)}', space=vmem, size = 0x12000, scoped, tag = 'internal scratch']
  %s0 = inlined_call_operand.hbm [shape: f32[8,16], index: 0, kind: input, shape index: {}]
  %s1 = inlined_call_operand.hbm [shape: f32[8,16], index: 1, kind: input, shape index: {}]
  %s2 = inlined_call_operand.hbm [shape: f32[8,16], index: 2, kind: input, shape index: {}]
  %s3 = inlined_call_operand.vmem [shape: f32[16,16], index: 3, kind: input, shape index: {}]
  %s4 = inlined_call_operand.hbm [shape: f32[1,16], index: 4, kind: input, shape index: {}]
  %s5 = inlined_call_operand.vmem [shape: f32[16,16], index: 5, kind: input, shape index: {}]
  %s6 = inlined_call_operand.hbm [shape: f32[1,16], index: 6, kind: input, shape index: {}]
  %s7 = inlined_call_operand.vmem [shape: f32[16,16], index: 7, kind: input, shape index: {}]
  %s8 = inlined_call_operand.hbm [shape: f32[16,16], index: 8, kind: input, shape index: {}]
  %s9 = inlined_call_operand.hbm [shape: f32[1,16], index: 9, kind: input, shape index: {}]
  %s10 = inlined_call_operand.vmem [shape: f32[16,16], index: 10, kind: input, shape index: {}]
  %s11 = inlined_call_operand.hbm [shape: f32[1,16], index: 11, kind: input, shape index: {}]
  %s12 = inlined_call_operand.hbm [shape: f32[16,32], index: 12, kind: input, shape index: {}]
  %s13 = inlined_call_operand.vmem [shape: f32[16,32], index: 13, kind: input, shape index: {}]
  %s14 = inlined_call_operand.hbm [shape: f32[1,32], index: 14, kind: input, shape index: {}]
  %s15 = inlined_call_operand.vmem [shape: f32[32,16], index: 15, kind: input, shape index: {}]
  %s16 = inlined_call_operand.hbm [shape: f32[1,16], index: 16, kind: input, shape index: {}]
  %s17 = inlined_call_operand.vmem [shape: f32[16,128], index: 17, kind: input, shape index: {}]
  %s18 = inlined_call_operand.vmem [shape: f32[1,128], index: 18, kind: input, shape index: {}]
  %s19 = inlined_call_operand.hbm [shape: f32[8,128], index: 19, kind: output, shape index: {}]
  %s20 = sld [smem:[#allocation0]]
  $region130: #{tpu_custom_call.1} parent=0
    _
  %s22 = ssub.s32 1, %s20
  %s23 = scalar_select 0, %s22, %s20
  $region1: #{tpu_custom_call.1} parent=0
    #allocation2 [shape = 'u8[4096]{0}', space=vmem, size = 0x1000, scoped, tag = 'input window, operand 0, single buffered']
    #allocation3 [shape = 's32[1]{0}', space=sflag, size = 0x4, scoped, tag = 'scoped memory for tpu_custom_call.1']
    #allocation4 [shape = 's32[1]{0}', space=sflag, size = 0x4, scoped, tag = 'scoped memory for tpu_custom_call.1']
    #allocation5 [shape = 'u8[4096]{0}', space=vmem, size = 0x1000, scoped, tag = 'input window, operand 1, single buffered']
    #allocation6 [shape = 's32[1]{0}', space=sflag, size = 0x4, scoped, tag = 'scoped memory for tpu_custom_call.1']
    #allocation7 [shape = 'u8[4096]{0}', space=vmem, size = 0x1000, scoped, tag = 'input window, operand 2, single buffered']
    #allocation8 [shape = 'u8[512]{0}', space=vmem, size = 0x400, scoped, tag = 'input window, operand 4, single buffered']
    #allocation9 [shape = 's32[1]{0}', space=sflag, size = 0x4, scoped, tag = 'scoped memory for tpu_custom_call.1']
    #allocation10 [shape = 'u8[512]{0}', space=vmem, size = 0x400, scoped, tag = 'input window, operand 6, single buffered']
    #allocation11 [shape = 'u8[8192]{0}', space=vmem, size = 0x2000, scoped, tag = 'input window, operand 8, single buffered']
    #allocation12 [shape = 's32[1]{0}', space=sflag, size = 0x4, scoped, tag = 'scoped memory for tpu_custom_call.1']
    #allocation13 [shape = 'u8[512]{0}', space=vmem, size = 0x400, scoped, tag = 'input window, operand 9, single buffered']
    #allocation14 [shape = 'u8[512]{0}', space=vmem, size = 0x400, scoped, tag = 'input window, operand 11, single buffered']
    #allocation15 [shape = 's32[1]{0}', space=sflag, size = 0x4, scoped, tag = 'scoped memory for tpu_custom_call.1']
    #allocation16 [shape = 'u8[8192]{0}', space=vmem, size = 0x2000, scoped, tag = 'input window, operand 12, single buffered']
    #allocation17 [shape = 'u8[512]{0}', space=vmem, size = 0x400, scoped, tag = 'input window, operand 14, single buffered']
    #allocation18 [shape = 's32[1]{0}', space=sflag, size = 0x4, scoped, tag = 'scoped memory for tpu_custom_call.1']
    #allocation19 [shape = 'u8[512]{0}', space=vmem, size = 0x400, scoped, tag = 'input window, operand 16, single buffered']
    #allocation20 [shape = 'u8[4096]{0}', space=vmem, size = 0x1000, scoped, tag = 'output window, operand 0, single buffered']
    %24 = vsyncpa [#allocation3], 0
    %25 = vsyncpa [#allocation6], 0
    %26 = vsyncpa [#allocation9], 0
    %27 = vsyncpa [#allocation12], 0
    %28 = vsyncpa [#allocation15], 0
    %29 = vsyncpa [#allocation18], 0
    %30 = vsyncpa [#allocation4], 0
    // Predicated region
    $region2: #{tpu_custom_call.1} parent=1 // pred_check
      _
    $region3: #{tpu_custom_call.1} parent=1 // pred_check_branch
      %32 = sbr.rel (0) target = $region5
    $region4: #{tpu_custom_call.1} parent=1 // pred_region
      %s34 = ssub.s32 128, 128
      %35 = vsyncadd [#allocation3], %s34
      %s37 = sshll.u32 [#allocation2], 4
      %s38 = int_to_ptr.vmem [resolvable:$true] %s37
      %40 = dma.hbm_to_vmem [thread:$0]  %s0, 128, %s38, [#allocation3]
    $region5: #{tpu_custom_call.1} parent=1 // pred_fallthru
      _
    // Predicated region
    $region6: #{tpu_custom_call.1} parent=1 // pred_check
      _
    $region7: #{tpu_custom_call.1} parent=1 // pred_check_branch
      %42 = sbr.rel (0) target = $region9
    $region8: #{tpu_custom_call.1} parent=1 // pred_region
      %s44 = ssub.s32 128, 128
      %45 = vsyncadd [#allocation6], %s44
      %s47 = sshll.u32 [#allocation5], 4
      %s48 = int_to_ptr.vmem [resolvable:$true] %s47
      %50 = dma.hbm_to_vmem [thread:$0]  %s1, 128, %s48, [#allocation6]
    $region9: #{tpu_custom_call.1} parent=1 // pred_fallthru
      _
    // Predicated region
    $region10: #{tpu_custom_call.1} parent=1 // pred_check
      _
    $region11: #{tpu_custom_call.1} parent=1 // pred_check_branch
      %52 = sbr.rel (0) target = $region13
    $region12: #{tpu_custom_call.1} parent=1 // pred_region
      %s54 = ssub.s32 128, 128
      %55 = vsyncadd [#allocation6], %s54
      %s57 = sshll.u32 [#allocation7], 4
      %s58 = int_to_ptr.vmem [resolvable:$true] %s57
      %60 = dma.hbm_to_vmem [thread:$0]  %s2, 128, %s58, [#allocation6]
    $region13: #{tpu_custom_call.1} parent=1 // pred_fallthru
      _
    // Predicated region
    $region14: #{tpu_custom_call.1} parent=1 // pred_check
      _
    $region15: #{tpu_custom_call.1} parent=1 // pred_check_branch
      %62 = sbr.rel (0) target = $region17
    $region16: #{tpu_custom_call.1} parent=1 // pred_region
      _
    $region17: #{tpu_custom_call.1} parent=1 // pred_fallthru
      _
    // Predicated region
    $region18: #{tpu_custom_call.1} parent=1 // pred_check
      _
    $region19: #{tpu_custom_call.1} parent=1 // pred_check_branch
      %64 = sbr.rel (0) target = $region21
    $region20: #{tpu_custom_call.1} parent=1 // pred_region
      %s66 = ssub.s32 16, 16
      %67 = vsyncadd [#allocation9], %s66
      %s69 = sshll.u32 [#allocation8], 4
      %s70 = int_to_ptr.vmem [resolvable:$true] %s69
      %72 = dma.hbm_to_vmem [thread:$0]  %s4, 16, %s70, [#allocation9]
    $region21: #{tpu_custom_call.1} parent=1 // pred_fallthru
      _
    // Predicated region
    $region22: #{tpu_custom_call.1} parent=1 // pred_check
      _
    $region23: #{tpu_custom_call.1} parent=1 // pred_check_branch
      %74 = sbr.rel (0) target = $region25
    $region24: #{tpu_custom_call.1} parent=1 // pred_region
      _
    $region25: #{tpu_custom_call.1} parent=1 // pred_fallthru
      _
    // Predicated region
    $region26: #{tpu_custom_call.1} parent=1 // pred_check
      _
    $region27: #{tpu_custom_call.1} parent=1 // pred_check_branch
      %76 = sbr.rel (0) target = $region29
    $region28: #{tpu_custom_call.1} parent=1 // pred_region
      %s78 = ssub.s32 16, 16
      %79 = vsyncadd [#allocation9], %s78
      %s81 = sshll.u32 [#allocation10], 4
      %s82 = int_to_ptr.vmem [resolvable:$true] %s81
      %84 = dma.hbm_to_vmem [thread:$0]  %s6, 16, %s82, [#allocation9]
    $region29: #{tpu_custom_call.1} parent=1 // pred_fallthru
      _
    // Predicated region
    $region30: #{tpu_custom_call.1} parent=1 // pred_check
      _
    $region31: #{tpu_custom_call.1} parent=1 // pred_check_branch
      %86 = sbr.rel (0) target = $region33
    $region32: #{tpu_custom_call.1} parent=1 // pred_region
      _
    $region33: #{tpu_custom_call.1} parent=1 // pred_fallthru
      _
    // Predicated region
    $region34: #{tpu_custom_call.1} parent=1 // pred_check
      _
    $region35: #{tpu_custom_call.1} parent=1 // pred_check_branch
      %88 = sbr.rel (0) target = $region37
    $region36: #{tpu_custom_call.1} parent=1 // pred_region
      %s90 = ssub.s32 256, 256
      %91 = vsyncadd [#allocation12], %s90
      %s92 = sshll.u32 [#allocation11], 4
      %s93 = int_to_ptr.vmem [resolvable:$true] %s92
      %98 = dma.hbm_to_vmem [thread:$0]  %s8, 256, %s93, [#allocation12], 128, 128, 8
    $region37: #{tpu_custom_call.1} parent=1 // pred_fallthru
      _
    // Predicated region
    $region38: #{tpu_custom_call.1} parent=1 // pred_check
      _
    $region39: #{tpu_custom_call.1} parent=1 // pred_check_branch
      %100 = sbr.rel (0) target = $region41
    $region40: #{tpu_custom_call.1} parent=1 // pred_region
      %s102 = ssub.s32 16, 16
      %103 = vsyncadd [#allocation12], %s102
      %s105 = sshll.u32 [#allocation13], 4
      %s106 = int_to_ptr.vmem [resolvable:$true] %s105
      %108 = dma.hbm_to_vmem [thread:$0]  %s9, 16, %s106, [#allocation12]
    $region41: #{tpu_custom_call.1} parent=1 // pred_fallthru
      _
    // Predicated region
    $region42: #{tpu_custom_call.1} parent=1 // pred_check
      _
    $region43: #{tpu_custom_call.1} parent=1 // pred_check_branch
      %110 = sbr.rel (0) target = $region45
    $region44: #{tpu_custom_call.1} parent=1 // pred_region
      _
    $region45: #{tpu_custom_call.1} parent=1 // pred_fallthru
      _
    // Predicated region
    $region46: #{tpu_custom_call.1} parent=1 // pred_check
      _
    $region47: #{tpu_custom_call.1} parent=1 // pred_check_branch
      %112 = sbr.rel (0) target = $region49
    $region48: #{tpu_custom_call.1} parent=1 // pred_region
      %s114 = ssub.s32 16, 16
      %115 = vsyncadd [#allocation15], %s114
      %s117 = sshll.u32 [#allocation14], 4
      %s118 = int_to_ptr.vmem [resolvable:$true] %s117
      %120 = dma.hbm_to_vmem [thread:$0]  %s11, 16, %s118, [#allocation15]
    $region49: #{tpu_custom_call.1} parent=1 // pred_fallthru
      _
    // Predicated region
    $region50: #{tpu_custom_call.1} parent=1 // pred_check
      _
    $region51: #{tpu_custom_call.1} parent=1 // pred_check_branch
      %122 = sbr.rel (0) target = $region53
    $region52: #{tpu_custom_call.1} parent=1 // pred_region
      %s124 = ssub.s32 256, 256
      %125 = vsyncadd [#allocation15], %s124
      %s126 = sshll.u32 [#allocation16], 4
      %s127 = int_to_ptr.vmem [resolvable:$true] %s126
      %132 = dma.hbm_to_vmem [thread:$0]  %s12, 256, %s127, [#allocation15], 128, 128, 8
    $region53: #{tpu_custom_call.1} parent=1 // pred_fallthru
      _
    // Predicated region
    $region54: #{tpu_custom_call.1} parent=1 // pred_check
      _
    $region55: #{tpu_custom_call.1} parent=1 // pred_check_branch
      %134 = sbr.rel (0) target = $region57
    $region56: #{tpu_custom_call.1} parent=1 // pred_region
      _
    $region57: #{tpu_custom_call.1} parent=1 // pred_fallthru
      _
    // Predicated region
    $region58: #{tpu_custom_call.1} parent=1 // pred_check
      _
    $region59: #{tpu_custom_call.1} parent=1 // pred_check_branch
      %136 = sbr.rel (0) target = $region61
    $region60: #{tpu_custom_call.1} parent=1 // pred_region
      %s138 = ssub.s32 16, 16
      %139 = vsyncadd [#allocation18], %s138
      %s141 = sshll.u32 [#allocation17], 4
      %s142 = int_to_ptr.vmem [resolvable:$true] %s141
      %144 = dma.hbm_to_vmem [thread:$0]  %s14, 16, %s142, [#allocation18]
    $region61: #{tpu_custom_call.1} parent=1 // pred_fallthru
      _
    // Predicated region
    $region62: #{tpu_custom_call.1} parent=1 // pred_check
      _
    $region63: #{tpu_custom_call.1} parent=1 // pred_check_branch
      %146 = sbr.rel (0) target = $region65
    $region64: #{tpu_custom_call.1} parent=1 // pred_region
      _
    $region65: #{tpu_custom_call.1} parent=1 // pred_fallthru
      _
    // Predicated region
    $region66: #{tpu_custom_call.1} parent=1 // pred_check
      _
    $region67: #{tpu_custom_call.1} parent=1 // pred_check_branch
      %148 = sbr.rel (0) target = $region69
    $region68: #{tpu_custom_call.1} parent=1 // pred_region
      %s150 = ssub.s32 16, 16
      %151 = vsyncadd [#allocation18], %s150
      %s153 = sshll.u32 [#allocation19], 4
      %s154 = int_to_ptr.vmem [resolvable:$true] %s153
      %156 = dma.hbm_to_vmem [thread:$0]  %s16, 16, %s154, [#allocation18]
    $region69: #{tpu_custom_call.1} parent=1 // pred_fallthru
      _
    // Predicated region
    $region70: #{tpu_custom_call.1} parent=1 // pred_check
      _
    $region71: #{tpu_custom_call.1} parent=1 // pred_check_branch
      %158 = sbr.rel (0) target = $region73
    $region72: #{tpu_custom_call.1} parent=1 // pred_region
      _
    $region73: #{tpu_custom_call.1} parent=1 // pred_fallthru
      _
    // Predicated region
    $region74: #{tpu_custom_call.1} parent=1 // pred_check
      _
    $region75: #{tpu_custom_call.1} parent=1 // pred_check_branch
      %160 = sbr.rel (0) target = $region77
    $region76: #{tpu_custom_call.1} parent=1 // pred_region
      _
    $region77: #{tpu_custom_call.1} parent=1 // pred_fallthru
      _
    // Predicated region
    $region78: #{tpu_custom_call.1} parent=1 // pred_check
      _
    $region79: #{tpu_custom_call.1} parent=1 // pred_check_branch
      %162 = sbr.rel (0) target = $region81
    $region80: #{tpu_custom_call.1} parent=1 // pred_region
      %163 = dma.done [#allocation3], 128
    $region81: #{tpu_custom_call.1} parent=1 // pred_fallthru
      _
    // Predicated region
    $region82: #{tpu_custom_call.1} parent=1 // pred_check
      _
    $region83: #{tpu_custom_call.1} parent=1 // pred_check_branch
      %165 = sbr.rel (0) target = $region85
    $region84: #{tpu_custom_call.1} parent=1 // pred_region
      %166 = dma.done [#allocation6], 128
    $region85: #{tpu_custom_call.1} parent=1 // pred_fallthru
      _
    // Predicated region
    $region86: #{tpu_custom_call.1} parent=1 // pred_check
      _
    $region87: #{tpu_custom_call.1} parent=1 // pred_check_branch
      %168 = sbr.rel (0) target = $region89
    $region88: #{tpu_custom_call.1} parent=1 // pred_region
      %169 = dma.done [#allocation6], 128
    $region89: #{tpu_custom_call.1} parent=1 // pred_fallthru
      _
    // Predicated region
    $region90: #{tpu_custom_call.1} parent=1 // pred_check
      _
    $region91: #{tpu_custom_call.1} parent=1 // pred_check_branch
      %171 = sbr.rel (0) target = $region93
    $region92: #{tpu_custom_call.1} parent=1 // pred_region
      %172 = dma.done [#allocation9], 16
    $region93: #{tpu_custom_call.1} parent=1 // pred_fallthru
      _
    // Predicated region
    $region94: #{tpu_custom_call.1} parent=1 // pred_check
      _
    $region95: #{tpu_custom_call.1} parent=1 // pred_check_branch
      %174 = sbr.rel (0) target = $region97
    $region96: #{tpu_custom_call.1} parent=1 // pred_region
      %175 = dma.done [#allocation9], 16
    $region97: #{tpu_custom_call.1} parent=1 // pred_fallthru
      _
    // Predicated region
    $region98: #{tpu_custom_call.1} parent=1 // pred_check
      _
    $region99: #{tpu_custom_call.1} parent=1 // pred_check_branch
      %177 = sbr.rel (0) target = $region101
    $region100: #{tpu_custom_call.1} parent=1 // pred_region
      %178 = dma.done [#allocation12], 256
    $region101: #{tpu_custom_call.1} parent=1 // pred_fallthru
      _
    // Predicated region
    $region102: #{tpu_custom_call.1} parent=1 // pred_check
      _
    $region103: #{tpu_custom_call.1} parent=1 // pred_check_branch
      %180 = sbr.rel (0) target = $region105
    $region104: #{tpu_custom_call.1} parent=1 // pred_region
      %181 = dma.done [#allocation12], 16
    $region105: #{tpu_custom_call.1} parent=1 // pred_fallthru
      _
    // Predicated region
    $region106: #{tpu_custom_call.1} parent=1 // pred_check
      _
    $region107: #{tpu_custom_call.1} parent=1 // pred_check_branch
      %183 = sbr.rel (0) target = $region109
    $region108: #{tpu_custom_call.1} parent=1 // pred_region
      %184 = dma.done [#allocation15], 16
    $region109: #{tpu_custom_call.1} parent=1 // pred_fallthru
      _
    // Predicated region
    $region110: #{tpu_custom_call.1} parent=1 // pred_check
      _
    $region111: #{tpu_custom_call.1} parent=1 // pred_check_branch
      %186 = sbr.rel (0) target = $region113
    $region112: #{tpu_custom_call.1} parent=1 // pred_region
      %187 = dma.done [#allocation15], 256
    $region113: #{tpu_custom_call.1} parent=1 // pred_fallthru
      _
    // Predicated region
    $region114: #{tpu_custom_call.1} parent=1 // pred_check
      _
    $region115: #{tpu_custom_call.1} parent=1 // pred_check_branch
      %189 = sbr.rel (0) target = $region117
    $region116: #{tpu_custom_call.1} parent=1 // pred_region
      %190 = dma.done [#allocation18], 16
    $region117: #{tpu_custom_call.1} parent=1 // pred_fallthru
      _
    // Predicated region
    $region118: #{tpu_custom_call.1} parent=1 // pred_check
      _
    $region119: #{tpu_custom_call.1} parent=1 // pred_check_branch
      %192 = sbr.rel (0) target = $region121
    $region120: #{tpu_custom_call.1} parent=1 // pred_region
      %193 = dma.done [#allocation18], 16
    $region121: #{tpu_custom_call.1} parent=1 // pred_fallthru
      _
    %v194 = vld [vmem:[#allocation2] sm:$0xff]
    %v195 = vld [vmem:[#allocation5] sm:$0xff]
    %v196 = vld [vmem:[#allocation7] sm:$0xff]
    %v197 = vld [vmem:[%s3] sm:$0xff]
    %v198 = vld [vmem:[%s3 + $0x8] sm:$0xff]
    %v199 = vld [vmem:[#allocation8] sm:$0x1]
    %v201 = vlaneseq
    %v202 = vshrl.u32 %v201, 7
    %v203 = vsub.s32 0, %v202
    %v204 = vrot.slane %v199, %v203
    %vm206 = vcmask 130048
    %v208 = vsel %vm206, %v196, 0
    %210 = vmatprep.subr.mxu0 0.0
    %211 = vmatpush1.msra.mxu0 %v197
    %212 = vmatprep.subr.mxu0 0.0
    %213 = vmatpush1.msra.mxu0 %v198
    %214 = vmatprep.subr.mxu0 0.0
    %215 = vmatpush1.msra.mxu0 0.0
    %216 = vmatprep.subr.mxu0 0.0
    %217 = vmatpush1.msra.mxu0 0.0
    %218 = vmatprep.subr.mxu0 0.0
    %219 = vmatpush1.msra.mxu0 0.0
    %220 = vmatprep.subr.mxu0 0.0
    %221 = vmatpush1.msra.mxu0 0.0
    %222 = vmatprep.subr.mxu0 0.0
    %223 = vmatpush1.msra.mxu0 0.0
    %224 = vmatprep.subr.mxu0 0.0
    %225 = vmatpush1.msra.mxu0 0.0
    %226 = vmatprep.subr.mxu0 0.0
    %227 = vmatpush1.msra.mxu0 0.0
    %228 = vmatprep.subr.mxu0 0.0
    %229 = vmatpush1.msra.mxu0 0.0
    %230 = vmatprep.subr.mxu0 0.0
    %231 = vmatpush1.msra.mxu0 0.0
    %232 = vmatprep.subr.mxu0 0.0
    %233 = vmatpush1.msra.mxu0 0.0
    %234 = vmatprep.subr.mxu0 0.0
    %235 = vmatpush1.msra.mxu0 0.0
    %236 = vmatprep.subr.mxu0 0.0
    %237 = vmatpush1.msra.mxu0 0.0
    %238 = vmatprep.subr.mxu0 0.0
    %239 = vmatpush1.msra.mxu0 0.0
    %240 = vmatprep.subr.mxu0 0.0
    %241 = vmatpush1.msra.mxu0 0.0
    %242 = vmatprep.subr.mxu0 0.0
    %243 = vmatpush1.msra.mxu0 0.0
    %244 = vmatprep.subr.mxu0 0.0
    %245 = vmatpush1.msra.mxu0 0.0
    %246 = vmatprep.subr.mxu0 0.0
    %247 = vmatpush1.msra.mxu0 0.0
    %248 = vmatprep.subr.mxu0 0.0
    %249 = vmatpush1.msra.mxu0 0.0
    %250 = vmatprep.subr.mxu0 0.0
    %251 = vmatpush1.msra.mxu0 0.0
    %252 = vmatprep.subr.mxu0 0.0
    %253 = vmatpush1.msra.mxu0 0.0
    %254 = vmatprep.subr.mxu0 0.0
    %255 = vmatpush1.msra.mxu0 0.0
    %256 = vmatprep.subr.mxu0 0.0
    %257 = vmatpush1.msra.mxu0 0.0
    %258 = vmatprep.subr.mxu0 0.0
    %259 = vmatpush1.msra.mxu0 0.0
    %260 = vmatprep.subr.mxu0 0.0
    %261 = vmatpush1.msra.mxu0 0.0
    %262 = vmatprep.subr.mxu0 0.0
    %263 = vmatpush1.msra.mxu0 0.0
    %264 = vmatprep.subr.mxu0 0.0
    %265 = vmatpush1.msra.mxu0 0.0
    %266 = vmatprep.subr.mxu0 0.0
    %267 = vmatpush1.msra.mxu0 0.0
    %268 = vmatprep.subr.mxu0 0.0
    %269 = vmatpush1.msra.mxu0 0.0
    %270 = vmatprep.subr.mxu0 0.0
    %271 = vmatpush1.msra.mxu0 0.0
    %272 = vmatprep.subr.mxu0 0.0
    %273 = vmatpush1.msra.mxu0 0.0
    %274 = vmatprep.mubr.f32.mxu0 0.0
    %275 = vmatmul.mubr.f32.gmra.mrb[0].mxu0 %v208
    %v276 = vpop.f32.mrb[0].mxu0
    %v277 = vadd.f32 %v204, %v276
    %v278 = vpop.f32.mrb[0].mxu0
    %279 = vdwg.mxu0
    %v280 = vmax.f32 %v277, 0.0
    %v281 = vld [vmem:[%s5] sm:$0xff]
    %v282 = vld [vmem:[%s5 + $0x8] sm:$0xff]
    %v283 = vld [vmem:[#allocation10] sm:$0x1]
    %v285 = vlaneseq
    %v286 = vshrl.u32 %v285, 7
    %v287 = vsub.s32 0, %v286
    %v288 = vrot.slane %v283, %v287
    %v291 = vsel %vm206, %v195, 0
    %293 = vmatprep.subr.mxu0 0.0
    %294 = vmatpush1.msra.mxu0 %v281
    %295 = vmatprep.subr.mxu0 0.0
    %296 = vmatpush1.msra.mxu0 %v282
    %297 = vmatprep.subr.mxu0 0.0
    %298 = vmatpush1.msra.mxu0 0.0
    %299 = vmatprep.subr.mxu0 0.0
    %300 = vmatpush1.msra.mxu0 0.0
    %301 = vmatprep.subr.mxu0 0.0
    %302 = vmatpush1.msra.mxu0 0.0
    %303 = vmatprep.subr.mxu0 0.0
    %304 = vmatpush1.msra.mxu0 0.0
    %305 = vmatprep.subr.mxu0 0.0
    %306 = vmatpush1.msra.mxu0 0.0
    %307 = vmatprep.subr.mxu0 0.0
    %308 = vmatpush1.msra.mxu0 0.0
    %309 = vmatprep.subr.mxu0 0.0
    %310 = vmatpush1.msra.mxu0 0.0
    %311 = vmatprep.subr.mxu0 0.0
    %312 = vmatpush1.msra.mxu0 0.0
    %313 = vmatprep.subr.mxu0 0.0
    %314 = vmatpush1.msra.mxu0 0.0
    %315 = vmatprep.subr.mxu0 0.0
    %316 = vmatpush1.msra.mxu0 0.0
    %317 = vmatprep.subr.mxu0 0.0
    %318 = vmatpush1.msra.mxu0 0.0
    %319 = vmatprep.subr.mxu0 0.0
    %320 = vmatpush1.msra.mxu0 0.0
    %321 = vmatprep.subr.mxu0 0.0
    %322 = vmatpush1.msra.mxu0 0.0
    %323 = vmatprep.subr.mxu0 0.0
    %324 = vmatpush1.msra.mxu0 0.0
    %325 = vmatprep.subr.mxu0 0.0
    %326 = vmatpush1.msra.mxu0 0.0
    %327 = vmatprep.subr.mxu0 0.0
    %328 = vmatpush1.msra.mxu0 0.0
    %329 = vmatprep.subr.mxu0 0.0
    %330 = vmatpush1.msra.mxu0 0.0
    %331 = vmatprep.subr.mxu0 0.0
    %332 = vmatpush1.msra.mxu0 0.0
    %333 = vmatprep.subr.mxu0 0.0
    %334 = vmatpush1.msra.mxu0 0.0
    %335 = vmatprep.subr.mxu0 0.0
    %336 = vmatpush1.msra.mxu0 0.0
    %337 = vmatprep.subr.mxu0 0.0
    %338 = vmatpush1.msra.mxu0 0.0
    %339 = vmatprep.subr.mxu0 0.0
    %340 = vmatpush1.msra.mxu0 0.0
    %341 = vmatprep.subr.mxu0 0.0
    %342 = vmatpush1.msra.mxu0 0.0
    %343 = vmatprep.subr.mxu0 0.0
    %344 = vmatpush1.msra.mxu0 0.0
    %345 = vmatprep.subr.mxu0 0.0
    %346 = vmatpush1.msra.mxu0 0.0
    %347 = vmatprep.subr.mxu0 0.0
    %348 = vmatpush1.msra.mxu0 0.0
    %349 = vmatprep.subr.mxu0 0.0
    %350 = vmatpush1.msra.mxu0 0.0
    %351 = vmatprep.subr.mxu0 0.0
    %352 = vmatpush1.msra.mxu0 0.0
    %353 = vmatprep.subr.mxu0 0.0
    %354 = vmatpush1.msra.mxu0 0.0
    %355 = vmatprep.subr.mxu0 0.0
    %356 = vmatpush1.msra.mxu0 0.0
    %357 = vmatprep.mubr.f32.mxu0 0.0
    %358 = vmatmul.mubr.f32.gmra.mrb[0].mxu0 %v291
    %v359 = vpop.f32.mrb[0].mxu0
    %v360 = vadd.f32 %v288, %v359
    %v361 = vpop.f32.mrb[0].mxu0
    %362 = vdwg.mxu0
    %v363 = vmax.f32 %v360, 0.0
    %v364 = vld [vmem:[%s7] sm:$0xff]
    %v365 = vld [vmem:[%s7 + $0x8] sm:$0xff]
    %v366 = vld [vmem:[#allocation11] sm:$0xff]
    %v367 = vld [vmem:[#allocation11 + $0x8] sm:$0xff]
    %v369 = vsel %vm206, %v363, 0
    %371 = vmatprep.subr.mxu0 0.0
    %372 = vmatpush1.msra.mxu0 %v366
    %373 = vmatprep.subr.mxu0 0.0
    %374 = vmatpush1.msra.mxu0 %v367
    %375 = vmatprep.subr.mxu0 0.0
    %376 = vmatpush1.msra.mxu0 0.0
    %377 = vmatprep.subr.mxu0 0.0
    %378 = vmatpush1.msra.mxu0 0.0
    %379 = vmatprep.subr.mxu0 0.0
    %380 = vmatpush1.msra.mxu0 0.0
    %381 = vmatprep.subr.mxu0 0.0
    %382 = vmatpush1.msra.mxu0 0.0
    %383 = vmatprep.subr.mxu0 0.0
    %384 = vmatpush1.msra.mxu0 0.0
    %385 = vmatprep.subr.mxu0 0.0
    %386 = vmatpush1.msra.mxu0 0.0
    %387 = vmatprep.subr.mxu0 0.0
    %388 = vmatpush1.msra.mxu0 0.0
    %389 = vmatprep.subr.mxu0 0.0
    %390 = vmatpush1.msra.mxu0 0.0
    %391 = vmatprep.subr.mxu0 0.0
    %392 = vmatpush1.msra.mxu0 0.0
    %393 = vmatprep.subr.mxu0 0.0
    %394 = vmatpush1.msra.mxu0 0.0
    %395 = vmatprep.subr.mxu0 0.0
    %396 = vmatpush1.msra.mxu0 0.0
    %397 = vmatprep.subr.mxu0 0.0
    %398 = vmatpush1.msra.mxu0 0.0
    %399 = vmatprep.subr.mxu0 0.0
    %400 = vmatpush1.msra.mxu0 0.0
    %401 = vmatprep.subr.mxu0 0.0
    %402 = vmatpush1.msra.mxu0 0.0
    %403 = vmatprep.subr.mxu0 0.0
    %404 = vmatpush1.msra.mxu0 0.0
    %405 = vmatprep.subr.mxu0 0.0
    %406 = vmatpush1.msra.mxu0 0.0
    %407 = vmatprep.subr.mxu0 0.0
    %408 = vmatpush1.msra.mxu0 0.0
    %409 = vmatprep.subr.mxu0 0.0
    %410 = vmatpush1.msra.mxu0 0.0
    %411 = vmatprep.subr.mxu0 0.0
    %412 = vmatpush1.msra.mxu0 0.0
    %413 = vmatprep.subr.mxu0 0.0
    %414 = vmatpush1.msra.mxu0 0.0
    %415 = vmatprep.subr.mxu0 0.0
    %416 = vmatpush1.msra.mxu0 0.0
    %417 = vmatprep.subr.mxu0 0.0
    %418 = vmatpush1.msra.mxu0 0.0
    %419 = vmatprep.subr.mxu0 0.0
    %420 = vmatpush1.msra.mxu0 0.0
    %421 = vmatprep.subr.mxu0 0.0
    %422 = vmatpush1.msra.mxu0 0.0
    %423 = vmatprep.subr.mxu0 0.0
    %424 = vmatpush1.msra.mxu0 0.0
    %425 = vmatprep.subr.mxu0 0.0
    %426 = vmatpush1.msra.mxu0 0.0
    %427 = vmatprep.subr.mxu0 0.0
    %428 = vmatpush1.msra.mxu0 0.0
    %429 = vmatprep.subr.mxu0 0.0
    %430 = vmatpush1.msra.mxu0 0.0
    %431 = vmatprep.subr.mxu0 0.0
    %432 = vmatpush1.msra.mxu0 0.0
    %433 = vmatprep.subr.mxu0 0.0
    %434 = vmatpush1.msra.mxu0 0.0
    %435 = vmatprep.mubr.f32.mxu0 0.0
    %436 = vmatmul.mubr.f32.gmra.mrb[0].mxu0 %v369
    %v437 = vpop.f32.mrb[0].mxu0
    %v438 = vadd.f32 0.0, %v437
    %v439 = vpop.f32.mrb[0].mxu0
    %440 = vdwg.mxu0
    %v442 = vsel %vm206, %v280, 0
    %444 = vmatprep.subr.mxu0 0.0
    %445 = vmatpush1.msra.mxu0 %v364
    %446 = vmatprep.subr.mxu0 0.0
    %447 = vmatpush1.msra.mxu0 %v365
    %448 = vmatprep.subr.mxu0 0.0
    %449 = vmatpush1.msra.mxu0 0.0
    %450 = vmatprep.subr.mxu0 0.0
    %451 = vmatpush1.msra.mxu0 0.0
    %452 = vmatprep.subr.mxu0 0.0
    %453 = vmatpush1.msra.mxu0 0.0
    %454 = vmatprep.subr.mxu0 0.0
    %455 = vmatpush1.msra.mxu0 0.0
    %456 = vmatprep.subr.mxu0 0.0
    %457 = vmatpush1.msra.mxu0 0.0
    %458 = vmatprep.subr.mxu0 0.0
    %459 = vmatpush1.msra.mxu0 0.0
    %460 = vmatprep.subr.mxu0 0.0
    %461 = vmatpush1.msra.mxu0 0.0
    %462 = vmatprep.subr.mxu0 0.0
    %463 = vmatpush1.msra.mxu0 0.0
    %464 = vmatprep.subr.mxu0 0.0
    %465 = vmatpush1.msra.mxu0 0.0
    %466 = vmatprep.subr.mxu0 0.0
    %467 = vmatpush1.msra.mxu0 0.0
    %468 = vmatprep.subr.mxu0 0.0
    %469 = vmatpush1.msra.mxu0 0.0
    %470 = vmatprep.subr.mxu0 0.0
    %471 = vmatpush1.msra.mxu0 0.0
    %472 = vmatprep.subr.mxu0 0.0
    %473 = vmatpush1.msra.mxu0 0.0
    %474 = vmatprep.subr.mxu0 0.0
    %475 = vmatpush1.msra.mxu0 0.0
    %476 = vmatprep.subr.mxu0 0.0
    %477 = vmatpush1.msra.mxu0 0.0
    %478 = vmatprep.subr.mxu0 0.0
    %479 = vmatpush1.msra.mxu0 0.0
    %480 = vmatprep.subr.mxu0 0.0
    %481 = vmatpush1.msra.mxu0 0.0
    %482 = vmatprep.subr.mxu0 0.0
    %483 = vmatpush1.msra.mxu0 0.0
    %484 = vmatprep.subr.mxu0 0.0
    %485 = vmatpush1.msra.mxu0 0.0
    %486 = vmatprep.subr.mxu0 0.0
    %487 = vmatpush1.msra.mxu0 0.0
    %488 = vmatprep.subr.mxu0 0.0
    %489 = vmatpush1.msra.mxu0 0.0
    %490 = vmatprep.subr.mxu0 0.0
    %491 = vmatpush1.msra.mxu0 0.0
    %492 = vmatprep.subr.mxu0 0.0
    %493 = vmatpush1.msra.mxu0 0.0
    %494 = vmatprep.subr.mxu0 0.0
    %495 = vmatpush1.msra.mxu0 0.0
    %496 = vmatprep.subr.mxu0 0.0
    %497 = vmatpush1.msra.mxu0 0.0
    %498 = vmatprep.subr.mxu0 0.0
    %499 = vmatpush1.msra.mxu0 0.0
    %500 = vmatprep.subr.mxu0 0.0
    %501 = vmatpush1.msra.mxu0 0.0
    %502 = vmatprep.subr.mxu0 0.0
    %503 = vmatpush1.msra.mxu0 0.0
    %504 = vmatprep.subr.mxu0 0.0
    %505 = vmatpush1.msra.mxu0 0.0
    %506 = vmatprep.subr.mxu0 0.0
    %507 = vmatpush1.msra.mxu0 0.0
    %508 = vmatprep.mubr.f32.mxu0 0.0
    %509 = vmatmul.mubr.f32.gmra.mrb[0].mxu0 %v442
    %v510 = vpop.f32.mrb[0].mxu0
    %v511 = vadd.f32 %v438, %v510
    %v512 = vpop.f32.mrb[0].mxu0
    %513 = vdwg.mxu0
    %v514 = vld [vmem:[#allocation13] sm:$0x1]
    %v516 = vlaneseq
    %v517 = vshrl.u32 %v516, 7
    %v518 = vsub.s32 0, %v517
    %v519 = vrot.slane %v514, %v518
    %v521 = vadd.f32 %v511, %v519
    %v522 = vmax.f32 %v521, 0.0
    %v523 = vld [vmem:[%s10] sm:$0xff]
    %v524 = vld [vmem:[%s10 + $0x8] sm:$0xff]
    %v525 = vld [vmem:[#allocation14] sm:$0x1]
    %v527 = vlaneseq
    %v528 = vshrl.u32 %v527, 7
    %v529 = vsub.s32 0, %v528
    %v530 = vrot.slane %v525, %v529
    %v533 = vsel %vm206, %v194, 0
    %535 = vmatprep.subr.mxu0 0.0
    %536 = vmatpush1.msra.mxu0 %v523
    %537 = vmatprep.subr.mxu0 0.0
    %538 = vmatpush1.msra.mxu0 %v524
    %539 = vmatprep.subr.mxu0 0.0
    %540 = vmatpush1.msra.mxu0 0.0
    %541 = vmatprep.subr.mxu0 0.0
    %542 = vmatpush1.msra.mxu0 0.0
    %543 = vmatprep.subr.mxu0 0.0
    %544 = vmatpush1.msra.mxu0 0.0
    %545 = vmatprep.subr.mxu0 0.0
    %546 = vmatpush1.msra.mxu0 0.0
    %547 = vmatprep.subr.mxu0 0.0
    %548 = vmatpush1.msra.mxu0 0.0
    %549 = vmatprep.subr.mxu0 0.0
    %550 = vmatpush1.msra.mxu0 0.0
    %551 = vmatprep.subr.mxu0 0.0
    %552 = vmatpush1.msra.mxu0 0.0
    %553 = vmatprep.subr.mxu0 0.0
    %554 = vmatpush1.msra.mxu0 0.0
    %555 = vmatprep.subr.mxu0 0.0
    %556 = vmatpush1.msra.mxu0 0.0
    %557 = vmatprep.subr.mxu0 0.0
    %558 = vmatpush1.msra.mxu0 0.0
    %559 = vmatprep.subr.mxu0 0.0
    %560 = vmatpush1.msra.mxu0 0.0
    %561 = vmatprep.subr.mxu0 0.0
    %562 = vmatpush1.msra.mxu0 0.0
    %563 = vmatprep.subr.mxu0 0.0
    %564 = vmatpush1.msra.mxu0 0.0
    %565 = vmatprep.subr.mxu0 0.0
    %566 = vmatpush1.msra.mxu0 0.0
    %567 = vmatprep.subr.mxu0 0.0
    %568 = vmatpush1.msra.mxu0 0.0
    %569 = vmatprep.subr.mxu0 0.0
    %570 = vmatpush1.msra.mxu0 0.0
    %571 = vmatprep.subr.mxu0 0.0
    %572 = vmatpush1.msra.mxu0 0.0
    %573 = vmatprep.subr.mxu0 0.0
    %574 = vmatpush1.msra.mxu0 0.0
    %575 = vmatprep.subr.mxu0 0.0
    %576 = vmatpush1.msra.mxu0 0.0
    %577 = vmatprep.subr.mxu0 0.0
    %578 = vmatpush1.msra.mxu0 0.0
    %579 = vmatprep.subr.mxu0 0.0
    %580 = vmatpush1.msra.mxu0 0.0
    %581 = vmatprep.subr.mxu0 0.0
    %582 = vmatpush1.msra.mxu0 0.0
    %583 = vmatprep.subr.mxu0 0.0
    %584 = vmatpush1.msra.mxu0 0.0
    %585 = vmatprep.subr.mxu0 0.0
    %586 = vmatpush1.msra.mxu0 0.0
    %587 = vmatprep.subr.mxu0 0.0
    %588 = vmatpush1.msra.mxu0 0.0
    %589 = vmatprep.subr.mxu0 0.0
    %590 = vmatpush1.msra.mxu0 0.0
    %591 = vmatprep.subr.mxu0 0.0
    %592 = vmatpush1.msra.mxu0 0.0
    %593 = vmatprep.subr.mxu0 0.0
    %594 = vmatpush1.msra.mxu0 0.0
    %595 = vmatprep.subr.mxu0 0.0
    %596 = vmatpush1.msra.mxu0 0.0
    %597 = vmatprep.subr.mxu0 0.0
    %598 = vmatpush1.msra.mxu0 0.0
    %599 = vmatprep.mubr.f32.mxu0 0.0
    %600 = vmatmul.mubr.f32.gmra.mrb[0].mxu0 %v533
    %v601 = vpop.f32.mrb[0].mxu0
    %v602 = vadd.f32 %v530, %v601
    %v603 = vpop.f32.mrb[0].mxu0
    %604 = vdwg.mxu0
    %v605 = vmax.f32 %v602, 0.0
    %v606 = vld [vmem:[#allocation16] sm:$0xff]
    %v607 = vld [vmem:[#allocation16 + $0x8] sm:$0xff]
    %v608 = vld [vmem:[%s13] sm:$0xff]
    %v609 = vld [vmem:[%s13 + $0x8] sm:$0xff]
    %v611 = vsel %vm206, %v605, 0
    %613 = vmatprep.subr.mxu0 0.0
    %614 = vmatpush1.msra.mxu0 %v608
    %615 = vmatprep.subr.mxu0 0.0
    %616 = vmatpush1.msra.mxu0 %v609
    %617 = vmatprep.subr.mxu0 0.0
    %618 = vmatpush1.msra.mxu0 0.0
    %619 = vmatprep.subr.mxu0 0.0
    %620 = vmatpush1.msra.mxu0 0.0
    %621 = vmatprep.subr.mxu0 0.0
    %622 = vmatpush1.msra.mxu0 0.0
    %623 = vmatprep.subr.mxu0 0.0
    %624 = vmatpush1.msra.mxu0 0.0
    %625 = vmatprep.subr.mxu0 0.0
    %626 = vmatpush1.msra.mxu0 0.0
    %627 = vmatprep.subr.mxu0 0.0
    %628 = vmatpush1.msra.mxu0 0.0
    %629 = vmatprep.subr.mxu0 0.0
    %630 = vmatpush1.msra.mxu0 0.0
    %631 = vmatprep.subr.mxu0 0.0
    %632 = vmatpush1.msra.mxu0 0.0
    %633 = vmatprep.subr.mxu0 0.0
    %634 = vmatpush1.msra.mxu0 0.0
    %635 = vmatprep.subr.mxu0 0.0
    %636 = vmatpush1.msra.mxu0 0.0
    %637 = vmatprep.subr.mxu0 0.0
    %638 = vmatpush1.msra.mxu0 0.0
    %639 = vmatprep.subr.mxu0 0.0
    %640 = vmatpush1.msra.mxu0 0.0
    %641 = vmatprep.subr.mxu0 0.0
    %642 = vmatpush1.msra.mxu0 0.0
    %643 = vmatprep.subr.mxu0 0.0
    %644 = vmatpush1.msra.mxu0 0.0
    %645 = vmatprep.subr.mxu0 0.0
    %646 = vmatpush1.msra.mxu0 0.0
    %647 = vmatprep.subr.mxu0 0.0
    %648 = vmatpush1.msra.mxu0 0.0
    %649 = vmatprep.subr.mxu0 0.0
    %650 = vmatpush1.msra.mxu0 0.0
    %651 = vmatprep.subr.mxu0 0.0
    %652 = vmatpush1.msra.mxu0 0.0
    %653 = vmatprep.subr.mxu0 0.0
    %654 = vmatpush1.msra.mxu0 0.0
    %655 = vmatprep.subr.mxu0 0.0
    %656 = vmatpush1.msra.mxu0 0.0
    %657 = vmatprep.subr.mxu0 0.0
    %658 = vmatpush1.msra.mxu0 0.0
    %659 = vmatprep.subr.mxu0 0.0
    %660 = vmatpush1.msra.mxu0 0.0
    %661 = vmatprep.subr.mxu0 0.0
    %662 = vmatpush1.msra.mxu0 0.0
    %663 = vmatprep.subr.mxu0 0.0
    %664 = vmatpush1.msra.mxu0 0.0
    %665 = vmatprep.subr.mxu0 0.0
    %666 = vmatpush1.msra.mxu0 0.0
    %667 = vmatprep.subr.mxu0 0.0
    %668 = vmatpush1.msra.mxu0 0.0
    %669 = vmatprep.subr.mxu0 0.0
    %670 = vmatpush1.msra.mxu0 0.0
    %671 = vmatprep.subr.mxu0 0.0
    %672 = vmatpush1.msra.mxu0 0.0
    %673 = vmatprep.subr.mxu0 0.0
    %674 = vmatpush1.msra.mxu0 0.0
    %675 = vmatprep.subr.mxu0 0.0
    %676 = vmatpush1.msra.mxu0 0.0
    %677 = vmatprep.mubr.f32.mxu0 0.0
    %678 = vmatmul.mubr.f32.gmra.mrb[0].mxu0 %v611
    %v679 = vpop.f32.mrb[0].mxu0
    %v680 = vadd.f32 0.0, %v679
    %v681 = vpop.f32.mrb[0].mxu0
    %682 = vdwg.mxu0
    %v684 = vsel %vm206, %v522, 0
    %686 = vmatprep.subr.mxu0 0.0
    %687 = vmatpush1.msra.mxu0 %v606
    %688 = vmatprep.subr.mxu0 0.0
    %689 = vmatpush1.msra.mxu0 %v607
    %690 = vmatprep.subr.mxu0 0.0
    %691 = vmatpush1.msra.mxu0 0.0
    %692 = vmatprep.subr.mxu0 0.0
    %693 = vmatpush1.msra.mxu0 0.0
    %694 = vmatprep.subr.mxu0 0.0
    %695 = vmatpush1.msra.mxu0 0.0
    %696 = vmatprep.subr.mxu0 0.0
    %697 = vmatpush1.msra.mxu0 0.0
    %698 = vmatprep.subr.mxu0 0.0
    %699 = vmatpush1.msra.mxu0 0.0
    %700 = vmatprep.subr.mxu0 0.0
    %701 = vmatpush1.msra.mxu0 0.0
    %702 = vmatprep.subr.mxu0 0.0
    %703 = vmatpush1.msra.mxu0 0.0
    %704 = vmatprep.subr.mxu0 0.0
    %705 = vmatpush1.msra.mxu0 0.0
    %706 = vmatprep.subr.mxu0 0.0
    %707 = vmatpush1.msra.mxu0 0.0
    %708 = vmatprep.subr.mxu0 0.0
    %709 = vmatpush1.msra.mxu0 0.0
    %710 = vmatprep.subr.mxu0 0.0
    %711 = vmatpush1.msra.mxu0 0.0
    %712 = vmatprep.subr.mxu0 0.0
    %713 = vmatpush1.msra.mxu0 0.0
    %714 = vmatprep.subr.mxu0 0.0
    %715 = vmatpush1.msra.mxu0 0.0
    %716 = vmatprep.subr.mxu0 0.0
    %717 = vmatpush1.msra.mxu0 0.0
    %718 = vmatprep.subr.mxu0 0.0
    %719 = vmatpush1.msra.mxu0 0.0
    %720 = vmatprep.subr.mxu0 0.0
    %721 = vmatpush1.msra.mxu0 0.0
    %722 = vmatprep.subr.mxu0 0.0
    %723 = vmatpush1.msra.mxu0 0.0
    %724 = vmatprep.subr.mxu0 0.0
    %725 = vmatpush1.msra.mxu0 0.0
    %726 = vmatprep.subr.mxu0 0.0
    %727 = vmatpush1.msra.mxu0 0.0
    %728 = vmatprep.subr.mxu0 0.0
    %729 = vmatpush1.msra.mxu0 0.0
    %730 = vmatprep.subr.mxu0 0.0
    %731 = vmatpush1.msra.mxu0 0.0
    %732 = vmatprep.subr.mxu0 0.0
    %733 = vmatpush1.msra.mxu0 0.0
    %734 = vmatprep.subr.mxu0 0.0
    %735 = vmatpush1.msra.mxu0 0.0
    %736 = vmatprep.subr.mxu0 0.0
    %737 = vmatpush1.msra.mxu0 0.0
    %738 = vmatprep.subr.mxu0 0.0
    %739 = vmatpush1.msra.mxu0 0.0
    %740 = vmatprep.subr.mxu0 0.0
    %741 = vmatpush1.msra.mxu0 0.0
    %742 = vmatprep.subr.mxu0 0.0
    %743 = vmatpush1.msra.mxu0 0.0
    %744 = vmatprep.subr.mxu0 0.0
    %745 = vmatpush1.msra.mxu0 0.0
    %746 = vmatprep.subr.mxu0 0.0
    %747 = vmatpush1.msra.mxu0 0.0
    %748 = vmatprep.subr.mxu0 0.0
    %749 = vmatpush1.msra.mxu0 0.0
    %750 = vmatprep.mubr.f32.mxu0 0.0
    %751 = vmatmul.mubr.f32.gmra.mrb[0].mxu0 %v684
    %v752 = vpop.f32.mrb[0].mxu0
    %v753 = vadd.f32 %v680, %v752
    %v754 = vpop.f32.mrb[0].mxu0
    %755 = vdwg.mxu0
    %v756 = vld [vmem:[#allocation17] sm:$0x1]
    %v758 = vlaneseq
    %v759 = vshrl.u32 %v758, 7
    %v760 = vsub.s32 0, %v759
    %v761 = vrot.slane %v756, %v760
    %v763 = vadd.f32 %v753, %v761
    %v764 = vmax.f32 %v763, 0.0
    %v765 = vld [vmem:[%s15] sm:$0xff]
    %v766 = vld [vmem:[%s15 + $0x8] sm:$0xff]
    %v767 = vld [vmem:[%s15 + $0x10] sm:$0xff]
    %v768 = vld [vmem:[%s15 + $0x18] sm:$0xff]
    %v769 = vld [vmem:[#allocation19] sm:$0x1]
    %v771 = vlaneseq
    %v772 = vshrl.u32 %v771, 7
    %v773 = vsub.s32 0, %v772
    %v774 = vrot.slane %v769, %v773
    %vm776 = vcmask 261120
    %v778 = vsel %vm776, %v764, 0
    %780 = vmatprep.subr.mxu0 0.0
    %781 = vmatpush1.msra.mxu0 %v765
    %782 = vmatprep.subr.mxu0 0.0
    %783 = vmatpush1.msra.mxu0 %v766
    %784 = vmatprep.subr.mxu0 0.0
    %785 = vmatpush1.msra.mxu0 %v767
    %786 = vmatprep.subr.mxu0 0.0
    %787 = vmatpush1.msra.mxu0 %v768
    %788 = vmatprep.subr.mxu0 0.0
    %789 = vmatpush1.msra.mxu0 0.0
    %790 = vmatprep.subr.mxu0 0.0
    %791 = vmatpush1.msra.mxu0 0.0
    %792 = vmatprep.subr.mxu0 0.0
    %793 = vmatpush1.msra.mxu0 0.0
    %794 = vmatprep.subr.mxu0 0.0
    %795 = vmatpush1.msra.mxu0 0.0
    %796 = vmatprep.subr.mxu0 0.0
    %797 = vmatpush1.msra.mxu0 0.0
    %798 = vmatprep.subr.mxu0 0.0
    %799 = vmatpush1.msra.mxu0 0.0
    %800 = vmatprep.subr.mxu0 0.0
    %801 = vmatpush1.msra.mxu0 0.0
    %802 = vmatprep.subr.mxu0 0.0
    %803 = vmatpush1.msra.mxu0 0.0
    %804 = vmatprep.subr.mxu0 0.0
    %805 = vmatpush1.msra.mxu0 0.0
    %806 = vmatprep.subr.mxu0 0.0
    %807 = vmatpush1.msra.mxu0 0.0
    %808 = vmatprep.subr.mxu0 0.0
    %809 = vmatpush1.msra.mxu0 0.0
    %810 = vmatprep.subr.mxu0 0.0
    %811 = vmatpush1.msra.mxu0 0.0
    %812 = vmatprep.subr.mxu0 0.0
    %813 = vmatpush1.msra.mxu0 0.0
    %814 = vmatprep.subr.mxu0 0.0
    %815 = vmatpush1.msra.mxu0 0.0
    %816 = vmatprep.subr.mxu0 0.0
    %817 = vmatpush1.msra.mxu0 0.0
    %818 = vmatprep.subr.mxu0 0.0
    %819 = vmatpush1.msra.mxu0 0.0
    %820 = vmatprep.subr.mxu0 0.0
    %821 = vmatpush1.msra.mxu0 0.0
    %822 = vmatprep.subr.mxu0 0.0
    %823 = vmatpush1.msra.mxu0 0.0
    %824 = vmatprep.subr.mxu0 0.0
    %825 = vmatpush1.msra.mxu0 0.0
    %826 = vmatprep.subr.mxu0 0.0
    %827 = vmatpush1.msra.mxu0 0.0
    %828 = vmatprep.subr.mxu0 0.0
    %829 = vmatpush1.msra.mxu0 0.0
    %830 = vmatprep.subr.mxu0 0.0
    %831 = vmatpush1.msra.mxu0 0.0
    %832 = vmatprep.subr.mxu0 0.0
    %833 = vmatpush1.msra.mxu0 0.0
    %834 = vmatprep.subr.mxu0 0.0
    %835 = vmatpush1.msra.mxu0 0.0
    %836 = vmatprep.subr.mxu0 0.0
    %837 = vmatpush1.msra.mxu0 0.0
    %838 = vmatprep.subr.mxu0 0.0
    %839 = vmatpush1.msra.mxu0 0.0
    %840 = vmatprep.subr.mxu0 0.0
    %841 = vmatpush1.msra.mxu0 0.0
    %842 = vmatprep.subr.mxu0 0.0
    %843 = vmatpush1.msra.mxu0 0.0
    %844 = vmatprep.mubr.f32.mxu0 0.0
    %845 = vmatmul.mubr.f32.gmra.mrb[0].mxu0 %v778
    %v846 = vpop.f32.mrb[0].mxu0
    %v847 = vadd.f32 %v774, %v846
    %v848 = vpop.f32.mrb[0].mxu0
    %849 = vdwg.mxu0
    %v850 = vmax.f32 %v847, 0.0
    %v851 = vld [vmem:[%s17] sm:$0xff]
    %v852 = vld [vmem:[%s17 + $0x8] sm:$0xff]
    %v853 = vld [vmem:[%s18] sm:$0x1]
    %v855 = vlaneseq
    %v856 = vshrl.u32 %v855, 7
    %v857 = vsub.s32 0, %v856
    %v858 = vrot.slane %v853, %v857
    %v861 = vsel %vm206, %v850, 0
    %863 = vmatprep.subr.mxu0 0.0
    %864 = vmatpush1.msra.mxu0 %v851
    %865 = vmatprep.subr.mxu0 0.0
    %866 = vmatpush1.msra.mxu0 %v852
    %867 = vmatprep.subr.mxu0 0.0
    %868 = vmatpush1.msra.mxu0 0.0
    %869 = vmatprep.subr.mxu0 0.0
    %870 = vmatpush1.msra.mxu0 0.0
    %871 = vmatprep.subr.mxu0 0.0
    %872 = vmatpush1.msra.mxu0 0.0
    %873 = vmatprep.subr.mxu0 0.0
    %874 = vmatpush1.msra.mxu0 0.0
    %875 = vmatprep.subr.mxu0 0.0
    %876 = vmatpush1.msra.mxu0 0.0
    %877 = vmatprep.subr.mxu0 0.0
    %878 = vmatpush1.msra.mxu0 0.0
    %879 = vmatprep.subr.mxu0 0.0
    %880 = vmatpush1.msra.mxu0 0.0
    %881 = vmatprep.subr.mxu0 0.0
    %882 = vmatpush1.msra.mxu0 0.0
    %883 = vmatprep.subr.mxu0 0.0
    %884 = vmatpush1.msra.mxu0 0.0
    %885 = vmatprep.subr.mxu0 0.0
    %886 = vmatpush1.msra.mxu0 0.0
    %887 = vmatprep.subr.mxu0 0.0
    %888 = vmatpush1.msra.mxu0 0.0
    %889 = vmatprep.subr.mxu0 0.0
    %890 = vmatpush1.msra.mxu0 0.0
    %891 = vmatprep.subr.mxu0 0.0
    %892 = vmatpush1.msra.mxu0 0.0
    %893 = vmatprep.subr.mxu0 0.0
    %894 = vmatpush1.msra.mxu0 0.0
    %895 = vmatprep.subr.mxu0 0.0
    %896 = vmatpush1.msra.mxu0 0.0
    %897 = vmatprep.subr.mxu0 0.0
    %898 = vmatpush1.msra.mxu0 0.0
    %899 = vmatprep.subr.mxu0 0.0
    %900 = vmatpush1.msra.mxu0 0.0
    %901 = vmatprep.subr.mxu0 0.0
    %902 = vmatpush1.msra.mxu0 0.0
    %903 = vmatprep.subr.mxu0 0.0
    %904 = vmatpush1.msra.mxu0 0.0
    %905 = vmatprep.subr.mxu0 0.0
    %906 = vmatpush1.msra.mxu0 0.0
    %907 = vmatprep.subr.mxu0 0.0
    %908 = vmatpush1.msra.mxu0 0.0
    %909 = vmatprep.subr.mxu0 0.0
    %910 = vmatpush1.msra.mxu0 0.0
    %911 = vmatprep.subr.mxu0 0.0
    %912 = vmatpush1.msra.mxu0 0.0
    %913 = vmatprep.subr.mxu0 0.0
    %914 = vmatpush1.msra.mxu0 0.0
    %915 = vmatprep.subr.mxu0 0.0
    %916 = vmatpush1.msra.mxu0 0.0
    %917 = vmatprep.subr.mxu0 0.0
    %918 = vmatpush1.msra.mxu0 0.0
    %919 = vmatprep.subr.mxu0 0.0
    %920 = vmatpush1.msra.mxu0 0.0
    %921 = vmatprep.subr.mxu0 0.0
    %922 = vmatpush1.msra.mxu0 0.0
    %923 = vmatprep.subr.mxu0 0.0
    %924 = vmatpush1.msra.mxu0 0.0
    %925 = vmatprep.subr.mxu0 0.0
    %926 = vmatpush1.msra.mxu0 0.0
    %927 = vmatprep.mubr.f32.mxu0 0.0
    %928 = vmatmul.mubr.f32.gmra.mrb[0].mxu0 %v861
    %v929 = vpop.f32.mrb[0].mxu0
    %v930 = vadd.f32 %v858, %v929
    %v931 = vpop.f32.mrb[0].mxu0
    %932 = vdwg.mxu0
    %v933 = vxor.u32 %v930, 2147483648
    %v934 = vmul.f32 %v933, 1.442695
    %v935 = vpow.pop %v934
    %v936 = vadd.f32 %v935, 1.0
    %v937 = vrcp.pop %v936
    %v938 = vmul.f32 1.0, %v937
    %939 = vst [vmem:[#allocation20] sm:$0xff] %v938
    // Predicated region
    $region122: #{tpu_custom_call.1} parent=1 // pred_check
      _
    $region123: #{tpu_custom_call.1} parent=1 // pred_check_branch
      %941 = sbr.rel (0) target = $region125
    $region124: #{tpu_custom_call.1} parent=1 // pred_region
      %s943 = ssub.s32 128, 128
      %944 = vsyncadd [#allocation4], %s943
      %s946 = sshll.u32 [#allocation20], 4
      %s947 = int_to_ptr.vmem [resolvable:$true] %s946
      %949 = dma.vmem_to_hbm [thread:$0]  %s947, 128, %s19, [#allocation4]
    $region125: #{tpu_custom_call.1} parent=1 // pred_fallthru
      _
    // Predicated region
    $region126: #{tpu_custom_call.1} parent=1 // pred_check
      _
    $region127: #{tpu_custom_call.1} parent=1 // pred_check_branch
      %951 = sbr.rel (0) target = $region129
    $region128: #{tpu_custom_call.1} parent=1 // pred_region
      %952 = dma.done [#allocation4], 128
    $region129: #{tpu_custom_call.1} parent=1 // pred_fallthru
      _
    %953 = vsyncpa [#allocation3], 1
    %954 = vsyncpa [#allocation6], 1
    %955 = vsyncpa [#allocation9], 1
    %956 = vsyncpa [#allocation12], 1
    %957 = vsyncpa [#allocation15], 1
    %958 = vsyncpa [#allocation18], 1
    %959 = vsyncpa [#allocation4], 1

</llo_original>
